<compile_context>
chip_gen: v7x
topology: tpu7x:2x2x1
jax: 0.10.0
libtpu: 0.0.40
codegen_flags: <defaults>
</compile_context>

<pallas_src>
import jax
import jax.numpy as jnp
from jax import lax
from jax.experimental import pallas as pl
from jax.experimental.pallas import tpu as pltpu


def _residual_conv1d_kernel(x_ref, halo_ref, w_ref, b_ref, o_ref):
    # x_ref:    (1, C, TL)   input tile (channels on sublanes, length on lanes)
    # halo_ref: (1, 1, C, 2) [left, right] neighbour columns (zeros at sequence ends)
    # w_ref:    (3C, C)      tap-stacked weights: rows [k*C:(k+1)*C] = weight[:, :, k]
    # b_ref:    (C, 1)       bias
    # o_ref:    (1, C, TL)   output tile
    c = x_ref.shape[1]
    tl = x_ref.shape[2]
    x = x_ref[0]                       # (C, TL)
    halo = halo_ref[0, 0]              # (C, 2)
    w = w_ref[...]                     # (3C, C), resident in VMEM

    # Optional low-precision MXU path: matmul operands follow the weight dtype,
    # accumulation stays f32 via preferred_element_type.
    x_mx = x if x.dtype == w.dtype else x.astype(w.dtype)
    halo_mx = halo if halo.dtype == w.dtype else halo.astype(w.dtype)

    # One stacked MXU matmul for all three taps ...
    p = jnp.dot(w, x_mx, preferred_element_type=jnp.float32)        # (3C, TL)
    # ... and one tiny matmul for the two boundary columns (cross-tile halo / zero pad).
    pfix = jnp.dot(w, halo_mx, preferred_element_type=jnp.float32)  # (3C, 2)

    p_prev = p[0:c]           # W0 @ x  -> needs x[l-1]: shift right by one lane
    p_mid = p[c:2 * c]        # W1 @ x
    p_next = p[2 * c:3 * c]   # W2 @ x  -> needs x[l+1]: shift left by one lane

    lane = lax.broadcasted_iota(jnp.int32, (c, tl), 1)
    # Lane shifts ride the XLU (pltpu.roll is basically free next to the MXU/VPU work);
    # only the wrapped boundary lane is patched with the halo contribution.
    left_tap = jnp.where(lane == 0, pfix[0:c, 0:1],
                         pltpu.roll(p_prev, shift=1, axis=1))
    right_tap = jnp.where(lane == tl - 1, pfix[2 * c:3 * c, 1:2],
                          pltpu.roll(p_next, shift=tl - 1, axis=1))

    acc = p_mid + left_tap + right_tap
    acc = acc + x.astype(jnp.float32) + b_ref[...].astype(jnp.float32)
    o_ref[0] = acc.astype(o_ref.dtype)


def _vmem_budget_bytes():
    # Generation-aware scoped-VMEM budget: ~75% of per-core capacity (v5e/v6e 128 MiB,
    # v7x 64 MiB), capped at 96 MiB, with a conservative fallback if the query fails.
    cap = None
    try:
        cap = pltpu.get_tpu_info().vmem_capacity_bytes
    except Exception:
        cap = None
    if not cap:
        cap = 64 * 1024 * 1024
    return min(int(cap) * 3 // 4, 96 * 1024 * 1024)


def _choose_tile_l(l_pad, c, itemsize, vmem_budget):
    """Pick TL: multiple of 128 dividing l_pad, ~4 MiB of in+out traffic per grid step,
    and a per-step VMEM working set that stays inside the budget."""
    # Per lane-column VMEM cost: double-buffered in+out DMA tiles (4*C*itemsize) plus the
    # f32 (3C, TL) stacked-matmul output, rolled copies and accumulator (~8*C*4 bytes).
    per_col = c * (4 * itemsize + 32)
    weight_resident = 2 * 3 * c * c * itemsize + 64 * 1024   # dbl-buffered W + bias/halo slack
    avail = max(vmem_budget - weight_resident, 256 * 1024)
    tl_vmem = avail // per_col
    tl_traffic = (4 * 1024 * 1024) // (2 * c * itemsize)     # ~4 MiB in+out per step
    want = max(128, min(tl_vmem, tl_traffic, l_pad))
    t = (want // 128) * 128
    while t > 128 and l_pad % t != 0:
        t -= 128
    return t


def residual_conv1d(x_ncl, weight, bias, *, tile_l=None, mxu_dtype=None):
    """Conv1d(C, C, k=3, s=1, p=1) + residual, PyTorch NCL layout.

    x_ncl: (N, C, L); weight: (C_out, C_in, 3); bias: (C_out,).
    tile_l: optional length-tile override (multiple of 128 dividing the padded L).
    mxu_dtype: optional matmul-operand dtype (e.g. jnp.bfloat16 on v5e).  Accumulation
      stays f32, but results no longer bit-match the f32 reference — opt-in only.
    """
    N, C, L = x_ncl.shape
    itemsize = jnp.dtype(x_ncl.dtype).itemsize

    # Pad L to a multiple of 128 so every tile is lane-aligned; the zero pad IS the
    # conv's boundary condition, so the valid region is unchanged; pad is sliced off.
    l_pad = ((L + 127) // 128) * 128
    x_p = x_ncl if l_pad == L else jnp.pad(x_ncl, ((0, 0), (0, 0), (0, l_pad - L)))

    if tile_l is None:
        tl = _choose_tile_l(l_pad, C, itemsize, _vmem_budget_bytes())
    else:
        if tile_l % 128 != 0 or l_pad % tile_l != 0:
            raise ValueError(f"tile_l={tile_l} must be a multiple of 128 dividing {l_pad}")
        tl = tile_l
    nt = l_pad // tl

    # Tiny halo side-array: for each length tile, the column just left and just right of
    # it (zeros at sequence boundaries).  NOTE: the size-2 lane axis pads 2->128 lanes in
    # VMEM, but the per-step block is only ~C*128*itemsize bytes and replaces any padded /
    # duplicate full-activation stream.
    x4 = x_p.reshape(N, C, nt, tl)
    first_cols = x4[:, :, :, 0]                                # (N, C, nt)
    last_cols = x4[:, :, :, tl - 1]                            # (N, C, nt)
    zero_col = jnp.zeros((N, C, 1), dtype=x_p.dtype)
    left_halo = jnp.concatenate([zero_col, last_cols[:, :, : nt - 1]], axis=-1)
    right_halo = jnp.concatenate([first_cols[:, :, 1:], zero_col], axis=-1)
    halo = jnp.transpose(jnp.stack([left_halo, right_halo], axis=-1), (0, 2, 1, 3))

    # Tap-stacked weights (3C, C): one MXU weight push per tile instead of three.
    w_stk = jnp.transpose(weight, (2, 0, 1)).reshape(3 * C, C)
    if mxu_dtype is not None:
        w_stk = w_stk.astype(mxu_dtype)
    b_2d = bias.reshape(C, 1)

    out = pl.pallas_call(
        _residual_conv1d_kernel,
        out_shape=jax.ShapeDtypeStruct((N, C, l_pad), x_ncl.dtype),
        grid_spec=pltpu.PrefetchScalarGridSpec(
            num_scalar_prefetch=0,
            grid=(N, nt),
            in_specs=[
                pl.BlockSpec((1, C, tl), lambda n, j: (n, 0, j)),       # x tile
                pl.BlockSpec((1, 1, C, 2), lambda n, j: (n, j, 0, 0)),  # halo columns
                pl.BlockSpec((3 * C, C), lambda n, j: (0, 0)),          # stacked weights (resident)
                pl.BlockSpec((C, 1), lambda n, j: (0, 0)),              # bias (resident)
            ],
            out_specs=pl.BlockSpec((1, C, tl), lambda n, j: (n, 0, j)),
        ),
        compiler_params=pltpu.CompilerParams(
            dimension_semantics=("parallel", "parallel"),
            vmem_limit_bytes=_vmem_budget_bytes(),
        ),
        # NOTE: pl.Buffered(1) on the weight/bias specs would halve their VMEM footprint
        # for very large C; left at the default buffering for portability.
    )(x_p, halo, w_stk, b_2d)

    return out if l_pad == L else out[:, :, :L]


def _reference(x_ncl, weight, bias):
    # Pure-JAX reference: conv1d (NCL, kernel 3, stride 1, pad 1) + bias + residual.
    y = lax.conv_general_dilated(
        x_ncl, weight,
        window_strides=(1,),
        padding=((1, 1),),
        dimension_numbers=("NCH", "OIH", "NCH"),
    )
    return y + bias[None, :, None] + x_ncl


if __name__ == "__main__":
    key = jax.random.PRNGKey(0)
    k_x, k_w, k_b, k_x2, k_x3 = jax.random.split(key, 5)

    N, C = 2, 16
    fan_in = C * 3
    bound = 1.0 / (fan_in ** 0.5)
    weight = jax.random.uniform(k_w, (C, C, 3), minval=-bound, maxval=bound,
                                dtype=jnp.float32)
    bias = jax.random.uniform(k_b, (C,), minval=-bound, maxval=bound,
                              dtype=jnp.float32)

    # Small case (L padded to a single 128-lane tile internally).
    L = 32
    x = jax.random.normal(k_x, (N, C, L), dtype=jnp.float32)
    out = jax.block_until_ready(residual_conv1d(x, weight, bias))
    ref = _reference(x, weight, bias)
    assert out.shape == (N, C, L)
    assert jnp.allclose(out, ref, atol=1e-4, rtol=1e-4), "mismatch vs reference (single tile)"

    # Multi-tile path with non-trivial cross-tile halo columns.
    L2 = 256
    x2 = jax.random.normal(k_x2, (N, C, L2), dtype=jnp.float32)
    out2 = jax.block_until_ready(residual_conv1d(x2, weight, bias, tile_l=128))
    ref2 = _reference(x2, weight, bias)
    assert jnp.allclose(out2, ref2, atol=1e-4, rtol=1e-4), "mismatch vs reference (tiled)"

    # Awkward L (not a multiple of 128): exercises the pad-and-slice path.
    L3 = 200
    x3 = jax.random.normal(k_x3, (N, C, L3), dtype=jnp.float32)
    out3 = jax.block_until_ready(residual_conv1d(x3, weight, bias, tile_l=128))
    ref3 = _reference(x3, weight, bias)
    assert jnp.allclose(out3, ref3, atol=1e-4, rtol=1e-4), "mismatch vs reference (padded)"

    print("KERNEL_OK")
</pallas_src>

<mosaic_0001>
module attributes {stable_mosaic.version = 11 : i64} {
  func.func @_residual_conv1d_kernel(%arg0: i32, %arg1: i32, %arg2: memref<1x16x128xf32, #tpu.memory_space<vmem>>, %arg3: memref<1x1x16x2xf32, #tpu.memory_space<vmem>>, %arg4: memref<48x16xf32, #tpu.memory_space<vmem>>, %arg5: memref<16x1xf32, #tpu.memory_space<vmem>>, %arg6: memref<1x16x128xf32, #tpu.memory_space<vmem>>) attributes {dimension_semantics = [#tpu.dimension_semantics<parallel>, #tpu.dimension_semantics<parallel>], iteration_bounds = array<i64: 2, 1>, scalar_prefetch = 0 : i64, scratch_operands = 0 : i64, tpu.core_type = #tpu.core_type<tc>, window_params = [{transform_indices = @transform_0, window_bounds = array<i64: 1, 16, 128>}, {transform_indices = @transform_1, window_bounds = array<i64: 1, 1, 16, 2>}, {pipeline_mode = #tpu.pipeline_mode<synchronous>, transform_indices = @transform_2, window_bounds = array<i64: 48, 16>}, {pipeline_mode = #tpu.pipeline_mode<synchronous>, transform_indices = @transform_3, window_bounds = array<i64: 16, 1>}, {transform_indices = @transform_4, window_bounds = array<i64: 1, 16, 128>}]} {
    %c0 = arith.constant 0 : index
    %c0_0 = arith.constant 0 : index
    %c0_1 = arith.constant 0 : index
    %0 = vector.load %arg2[%c0, %c0_0, %c0_1] : memref<1x16x128xf32, #tpu.memory_space<vmem>>, vector<1x16x128xf32>
    %1 = vector.shape_cast %0 : vector<1x16x128xf32> to vector<16x128xf32>
    %c0_2 = arith.constant 0 : index
    %c0_3 = arith.constant 0 : index
    %c0_4 = arith.constant 0 : index
    %c0_5 = arith.constant 0 : index
    %2 = vector.load %arg3[%c0_2, %c0_3, %c0_4, %c0_5] : memref<1x1x16x2xf32, #tpu.memory_space<vmem>>, vector<1x1x16x2xf32>
    %3 = vector.shape_cast %2 : vector<1x1x16x2xf32> to vector<16x2xf32>
    %c0_6 = arith.constant 0 : index
    %c0_7 = arith.constant 0 : index
    %4 = vector.load %arg4[%c0_6, %c0_7] : memref<48x16xf32, #tpu.memory_space<vmem>>, vector<48x16xf32>
    %cst = arith.constant dense<0.000000e+00> : vector<48x128xf32>
    %5 = tpu.matmul %4, %1, %cst {dimension_numbers = #tpu.dot_dimension_numbers<[1], [0], [0], [1], [0, 0, 1, 1], [], []>} : vector<48x16xf32>, vector<16x128xf32>, vector<48x128xf32> -> vector<48x128xf32>
    %cst_8 = arith.constant dense<0.000000e+00> : vector<48x2xf32>
    %6 = tpu.matmul %4, %3, %cst_8 {dimension_numbers = #tpu.dot_dimension_numbers<[1], [0], [0], [1], [0, 0, 1, 1], [], []>} : vector<48x16xf32>, vector<16x2xf32>, vector<48x2xf32> -> vector<48x2xf32>
    %7 = vector.extract_strided_slice %5 {offsets = [0, 0], sizes = [16, 128], strides = [1, 1]} : vector<48x128xf32> to vector<16x128xf32>
    %8 = vector.extract_strided_slice %5 {offsets = [16, 0], sizes = [16, 128], strides = [1, 1]} : vector<48x128xf32> to vector<16x128xf32>
    %9 = vector.extract_strided_slice %5 {offsets = [32, 0], sizes = [16, 128], strides = [1, 1]} : vector<48x128xf32> to vector<16x128xf32>
    %10 = tpu.iota {dimensions = array<i32: 1>} : vector<16x128xi32>
    %c0_i32 = arith.constant 0 : i32
    %11 = vector.broadcast %c0_i32 : i32 to vector<16x128xi32>
    %12 = arith.cmpi eq, %10, %11 : vector<16x128xi32>
    %13 = vector.extract_strided_slice %6 {offsets = [0, 0], sizes = [16, 1], strides = [1, 1]} : vector<48x2xf32> to vector<16x1xf32>
    %c1_i32 = arith.constant 1 : i32
    %14 = tpu.dynamic_rotate %7 by %c1_i32 dim 1 : vector<16x128xf32>, i32 -> vector<16x128xf32>
    %15 = vector.shape_cast %13 : vector<16x1xf32> to vector<16x1xf32>
    %16 = vector.broadcast %15 : vector<16x1xf32> to vector<16x128xf32>
    %17 = arith.select %12, %16, %14 : vector<16x128xi1>, vector<16x128xf32>
    %c127_i32 = arith.constant 127 : i32
    %18 = vector.broadcast %c127_i32 : i32 to vector<16x128xi32>
    %19 = arith.cmpi eq, %10, %18 : vector<16x128xi32>
    %20 = vector.extract_strided_slice %6 {offsets = [32, 1], sizes = [16, 1], strides = [1, 1]} : vector<48x2xf32> to vector<16x1xf32>
    %c127_i32_9 = arith.constant 127 : i32
    %21 = tpu.dynamic_rotate %9 by %c127_i32_9 dim 1 : vector<16x128xf32>, i32 -> vector<16x128xf32>
    %22 = vector.shape_cast %20 : vector<16x1xf32> to vector<16x1xf32>
    %23 = vector.broadcast %22 : vector<16x1xf32> to vector<16x128xf32>
    %24 = arith.select %19, %23, %21 : vector<16x128xi1>, vector<16x128xf32>
    %25 = arith.addf %8, %17 : vector<16x128xf32>
    %26 = arith.addf %25, %24 : vector<16x128xf32>
    %27 = arith.addf %26, %1 : vector<16x128xf32>
    %c0_10 = arith.constant 0 : index
    %c0_11 = arith.constant 0 : index
    %28 = vector.load %arg5[%c0_10, %c0_11] : memref<16x1xf32, #tpu.memory_space<vmem>>, vector<16x1xf32>
    %29 = vector.broadcast %28 : vector<16x1xf32> to vector<16x128xf32>
    %30 = arith.addf %27, %29 : vector<16x128xf32>
    %c0_12 = arith.constant 0 : index
    %c0_13 = arith.constant 0 : index
    %c0_14 = arith.constant 0 : index
    %31 = vector.load %arg6[%c0_12, %c0_13, %c0_14] : memref<1x16x128xf32, #tpu.memory_space<vmem>>, vector<1x16x128xf32>
    %32 = vector.shape_cast %31 : vector<1x16x128xf32> to vector<16x128xf32>
    %33 = vector.shape_cast %30 : vector<16x128xf32> to vector<1x16x128xf32>
    tpu.vector_store %arg6[%c0_12, %c0_13, %c0_14], %33 {strides = array<i32>} : memref<1x16x128xf32, #tpu.memory_space<vmem>>, vector<1x16x128xf32>,
    return
  }
  func.func @transform_0(%arg0: i32, %arg1: i32) -> (i32, i32, i32) {
    %c0_i32 = arith.constant 0 : i32
    %c0_i32_0 = arith.constant 0 : i32
    return %arg0, %c0_i32, %arg1 : i32, i32, i32
  }
  func.func @transform_1(%arg0: i32, %arg1: i32) -> (i32, i32, i32, i32) {
    %c0_i32 = arith.constant 0 : i32
    %c0_i32_0 = arith.constant 0 : i32
    %c0_i32_1 = arith.constant 0 : i32
    return %arg0, %arg1, %c0_i32, %c0_i32_0 : i32, i32, i32, i32
  }
  func.func @transform_2(%arg0: i32, %arg1: i32) -> (i32, i32) {
    %c0_i32 = arith.constant 0 : i32
    %c0_i32_0 = arith.constant 0 : i32
    %c0_i32_1 = arith.constant 0 : i32
    return %c0_i32, %c0_i32_0 : i32, i32
  }
  func.func @transform_3(%arg0: i32, %arg1: i32) -> (i32, i32) {
    %c0_i32 = arith.constant 0 : i32
    %c0_i32_0 = arith.constant 0 : i32
    %c0_i32_1 = arith.constant 0 : i32
    return %c0_i32, %c0_i32_0 : i32, i32
  }
  func.func @transform_4(%arg0: i32, %arg1: i32) -> (i32, i32, i32) {
    %c0_i32 = arith.constant 0 : i32
    %c0_i32_0 = arith.constant 0 : i32
    return %arg0, %c0_i32, %arg1 : i32, i32, i32
  }
}

</mosaic_0001>

<llo_original>
// kernel: tpu_custom_call.1
$region0: #{tpu_custom_call.1}
  #allocation0 [shape = 'u32[]', space=smem, size = 0x4, offset = 0x4, fixed_abs, tag = 'smem constant byte address 0x4 - core index']
  #allocation1 [shape = 'u32[144,128]{1,0:T(1,128)}', space=vmem, size = 0x12000, scoped, tag = 'internal scratch']
  %s0 = inlined_call_operand.vmem [shape: f32[2,16,128], index: 0, kind: input, shape index: {}]
  %s1 = inlined_call_operand.vmem [shape: f32[2,1,16,2], index: 1, kind: input, shape index: {}]
  %s2 = inlined_call_operand.vmem [shape: f32[48,16], index: 2, kind: input, shape index: {}]
  %s3 = inlined_call_operand.vmem [shape: f32[16,1], index: 3, kind: input, shape index: {}]
  %s4 = inlined_call_operand.hbm [shape: f32[2,16,128], index: 4, kind: output, shape index: {}]
  %s5 = sld [smem:[#allocation0]]
  $region49: #{tpu_custom_call.1} parent=0
    _
  %s7 = ssub.s32 1, %s5
  %s8 = scalar_select 0, %s7, %s5
  $region1: #{tpu_custom_call.1} parent=0
    #allocation2 [shape = 'u8[16384]{0}', space=vmem, size = 0x4000, scoped, tag = 'output window, operand 0']
    #allocation3 [shape = 's32[2]{0}', space=sflag, size = 0x8, scoped, tag = 'scoped memory for tpu_custom_call.1']
    %9 = vsyncpa [#allocation3], 0
    %s10 = scalar_lea.sflag [#allocation3], 1
    %11 = vsyncpa %s10, 0
    loop: start=0, step=1, limit=4
    $region2: #{tpu_custom_call.1} parent=1 // loop_pre_header
      _
    $region3: #{tpu_custom_call.1} parent=1 // loop_header
      %s13 = sphi 0, %s17
      %p14 = scmp.ge.s32.totalorder %s13, 4
      %s20 = sphi 0, %s32
      %s21 = sphi 0, %s28
      %s22 = sphi 0, %s20
      %s23 = sphi 0, %s21
      %s24 = sphi 0, %s22
      %s25 = sphi 0, %s23
      %s37 = sphi 0, %s39
      %s40 = sphi 0, %s37
      %s41 = sphi 0, %s40
      %s57 = sphi 0, %s41
      %s65 = sphi 0, %s67
      %s68 = sphi 0, %s65
      %s69 = sphi 0, %s68
      %s85 = sphi 0, %s69
      %s89 = sphi 0, %s89
      %s91 = sphi 0, %s89
      %s92 = sphi 0, %s91
      %s106 = sphi 0, %s92
      %s110 = sphi 0, %s110
      %s112 = sphi 0, %s110
      %s113 = sphi 0, %s112
      %s127 = sphi 0, %s113
      %s135 = sphi 0, %s137
      %s138 = sphi 0, %s135
      %s139 = sphi 0, %s138
      %s155 = sphi 0, %s139
    $region4: #{tpu_custom_call.1} parent=1 // loop_header_branch
      %16 = sbr.rel (%p14) target = $region8
    $region5: #{tpu_custom_call.1} parent=1 // loop_body
      %s18 = ssub.s32 %s13, 1
      %s19 = ssub.s32 %s13, 2
      %s26 = sadd.s32 1, %s21
      %p27 = scmp.ge.s32.totalorder %s26, 1
      %s28 = scalar_select %p27, 0, %s26
      %s29 = sadd.s32 1, %s20
      %s30 = scalar_select %p27, %s29, %s20
      %p31 = scmp.ge.s32.totalorder %s30, 2
      %s32 = scalar_select %p31, 0, %s30
      %s33 = ssub.s32 %s20, %s32
      %s34 = ssub.s32 %s21, %s28
      %s35 = sor.u32 %s33, %s34
      %p36 = scmp.eq.s32.totalorder %s35, 0
      %s38 = sadd.s32 %s37, 1
      %s39 = scalar_select %p36, %s37, %s38
      %p42 = pneg %p36
      %p43 = scmp.eq.s32.totalorder %s13, 1
      %p44 = por %p42, %p43
      %p45 = scmp.ne.s32.totalorder %s37, %s40
      %p46 = scmp.eq.s32.totalorder %s13, 0
      %p47 = por %p45, %p46
      %p48 = scmp.ne.s32.totalorder %s37, %s40
      %p49 = scmp.eq.s32.totalorder %s18, 1
      %p50 = por %p48, %p49
      %p51 = scmp.ne.s32.totalorder %s40, %s41
      %p52 = scmp.eq.s32.totalorder %s18, 0
      %p53 = por %p51, %p52
      %p54 = scmp.ne.s32.totalorder %s40, %s41
      %p55 = scmp.eq.s32.totalorder %s19, 1
      %p56 = por %p54, %p55
      %p58 = scmp.ne.s32.totalorder %s41, %s57
      %p59 = scmp.eq.s32.totalorder %s19, 0
      %p60 = por %p58, %p59
      %s61 = ssub.s32 %s20, %s32
      %s62 = ssub.s32 %s21, %s28
      %s63 = sor.u32 %s61, %s62
      %p64 = scmp.eq.s32.totalorder %s63, 0
      %s66 = sadd.s32 %s65, 1
      %s67 = scalar_select %p64, %s65, %s66
      %p70 = pneg %p64
      %p71 = scmp.eq.s32.totalorder %s13, 1
      %p72 = por %p70, %p71
      %p73 = scmp.ne.s32.totalorder %s65, %s68
      %p74 = scmp.eq.s32.totalorder %s13, 0
      %p75 = por %p73, %p74
      %p76 = scmp.ne.s32.totalorder %s65, %s68
      %p77 = scmp.eq.s32.totalorder %s18, 1
      %p78 = por %p76, %p77
      %p79 = scmp.ne.s32.totalorder %s68, %s69
      %p80 = scmp.eq.s32.totalorder %s18, 0
      %p81 = por %p79, %p80
      %p82 = scmp.ne.s32.totalorder %s68, %s69
      %p83 = scmp.eq.s32.totalorder %s19, 1
      %p84 = por %p82, %p83
      %p86 = scmp.ne.s32.totalorder %s69, %s85
      %p87 = scmp.eq.s32.totalorder %s19, 0
      %p88 = por %p86, %p87
      %s90 = sadd.s32 %s89, 1
      %p93 = scmp.eq.s32.totalorder %s13, 1
      %p94 = scmp.ne.s32.totalorder %s89, %s91
      %p95 = scmp.eq.s32.totalorder %s13, 0
      %p96 = por %p94, %p95
      %p97 = scmp.ne.s32.totalorder %s89, %s91
      %p98 = scmp.eq.s32.totalorder %s18, 1
      %p99 = por %p97, %p98
      %p100 = scmp.ne.s32.totalorder %s91, %s92
      %p101 = scmp.eq.s32.totalorder %s18, 0
      %p102 = por %p100, %p101
      %p103 = scmp.ne.s32.totalorder %s91, %s92
      %p104 = scmp.eq.s32.totalorder %s19, 1
      %p105 = por %p103, %p104
      %p107 = scmp.ne.s32.totalorder %s92, %s106
      %p108 = scmp.eq.s32.totalorder %s19, 0
      %p109 = por %p107, %p108
      %s111 = sadd.s32 %s110, 1
      %p114 = scmp.eq.s32.totalorder %s13, 1
      %p115 = scmp.ne.s32.totalorder %s110, %s112
      %p116 = scmp.eq.s32.totalorder %s13, 0
      %p117 = por %p115, %p116
      %p118 = scmp.ne.s32.totalorder %s110, %s112
      %p119 = scmp.eq.s32.totalorder %s18, 1
      %p120 = por %p118, %p119
      %p121 = scmp.ne.s32.totalorder %s112, %s113
      %p122 = scmp.eq.s32.totalorder %s18, 0
      %p123 = por %p121, %p122
      %p124 = scmp.ne.s32.totalorder %s112, %s113
      %p125 = scmp.eq.s32.totalorder %s19, 1
      %p126 = por %p124, %p125
      %p128 = scmp.ne.s32.totalorder %s113, %s127
      %p129 = scmp.eq.s32.totalorder %s19, 0
      %p130 = por %p128, %p129
      %s131 = ssub.s32 %s20, %s32
      %s132 = ssub.s32 %s21, %s28
      %s133 = sor.u32 %s131, %s132
      %p134 = scmp.eq.s32.totalorder %s133, 0
      %s136 = sadd.s32 %s135, 1
      %s137 = scalar_select %p134, %s135, %s136
      %p140 = pneg %p134
      %p141 = scmp.eq.s32.totalorder %s13, 1
      %p142 = por %p140, %p141
      %p143 = scmp.ne.s32.totalorder %s135, %s138
      %p144 = scmp.eq.s32.totalorder %s13, 0
      %p145 = por %p143, %p144
      %p146 = scmp.ne.s32.totalorder %s135, %s138
      %p147 = scmp.eq.s32.totalorder %s18, 1
      %p148 = por %p146, %p147
      %p149 = scmp.ne.s32.totalorder %s138, %s139
      %p150 = scmp.eq.s32.totalorder %s18, 0
      %p151 = por %p149, %p150
      %p152 = scmp.ne.s32.totalorder %s138, %s139
      %p153 = scmp.eq.s32.totalorder %s19, 1
      %p154 = por %p152, %p153
      %p156 = scmp.ne.s32.totalorder %s139, %s155
      %p157 = scmp.eq.s32.totalorder %s19, 0
      %p158 = por %p156, %p157
      %p159 = scmp.le.s32.totalorder 1, %s13
      %p160 = scmp.lt.s32.totalorder %s13, 3
      %p161 = pnand %p159, %p160
      %p162 = pneg %p161
      // Predicated region
      $region9: #{tpu_custom_call.1} parent=5 // pred_check
        _
      $region10: #{tpu_custom_call.1} parent=5 // pred_check_branch
        %164 = sbr.rel (%p161) target = $region12
      $region11: #{tpu_custom_call.1} parent=5 // pred_region
        %s165 = ssub.s32 %s13, 1
        // Predicated region
        $region13: #{tpu_custom_call.1} parent=11 // pred_check
          %p166 = pneg %p102
        $region14: #{tpu_custom_call.1} parent=11 // pred_check_branch
          %168 = sbr.rel (%p166) target = $region16
        $region15: #{tpu_custom_call.1} parent=11 // pred_region
          _
        $region16: #{tpu_custom_call.1} parent=11 // pred_fallthru
          _
        // Predicated region
        $region17: #{tpu_custom_call.1} parent=11 // pred_check
          %p169 = pneg %p123
        $region18: #{tpu_custom_call.1} parent=11 // pred_check_branch
          %171 = sbr.rel (%p169) target = $region20
        $region19: #{tpu_custom_call.1} parent=11 // pred_region
          _
        $region20: #{tpu_custom_call.1} parent=11 // pred_fallthru
          _
      $region12: #{tpu_custom_call.1} parent=5 // pred_fallthru
        _
      %p172 = scmp.lt.s32.totalorder %s13, 2
      // Predicated region
      $region21: #{tpu_custom_call.1} parent=5 // pred_check
        %p173 = pneg %p172
      $region22: #{tpu_custom_call.1} parent=5 // pred_check_branch
        %175 = sbr.rel (%p173) target = $region24
      $region23: #{tpu_custom_call.1} parent=5 // pred_region
        // Predicated region
        $region25: #{tpu_custom_call.1} parent=23 // pred_check
          %p176 = pneg %p47
        $region26: #{tpu_custom_call.1} parent=23 // pred_check_branch
          %178 = sbr.rel (%p176) target = $region28
        $region27: #{tpu_custom_call.1} parent=23 // pred_region
          %p179 = scmp.lt.s32.totalorder %s20, 1
          %s180 = scalar_select %p179, %s20, 1
          %p181 = scmp.lt.s32.totalorder %s21, 0
          %s182 = scalar_select %p181, %s21, 0
          %s183 = smul.addr %s180, 2
          %s184 = sadd.s32 %s182, %s183
          %s185 = smul.addr %s184, 8
          %s186 = scalar_lea.vmem %s0, %s185
        $region28: #{tpu_custom_call.1} parent=23 // pred_fallthru
          _
        // Predicated region
        $region29: #{tpu_custom_call.1} parent=23 // pred_check
          %p187 = pneg %p75
        $region30: #{tpu_custom_call.1} parent=23 // pred_check_branch
          %189 = sbr.rel (%p187) target = $region32
        $region31: #{tpu_custom_call.1} parent=23 // pred_region
          %p190 = scmp.lt.s32.totalorder %s20, 1
          %s191 = scalar_select %p190, %s20, 1
          %p192 = scmp.lt.s32.totalorder %s21, 0
          %s193 = scalar_select %p192, %s21, 0
          %s194 = smul.addr %s193, 2
          %s195 = smul.addr %s191, 2
          %s196 = sadd.s32 %s194, %s195
          %s197 = smul.addr %s196, 8
          %s198 = scalar_lea.vmem %s1, %s197
        $region32: #{tpu_custom_call.1} parent=23 // pred_fallthru
          _
      $region24: #{tpu_custom_call.1} parent=5 // pred_fallthru
        _
      %p199 = scmp.le.s32.totalorder 1, %s13
      %p200 = scmp.lt.s32.totalorder %s13, 3
      %p201 = pnand %p199, %p200
      %p202 = pneg %p201
      // Predicated region
      $region33: #{tpu_custom_call.1} parent=5 // pred_check
        _
      $region34: #{tpu_custom_call.1} parent=5 // pred_check_branch
        %204 = sbr.rel (%p201) target = $region36
      $region35: #{tpu_custom_call.1} parent=5 // pred_region
        %s205 = ssub.s32 %s13, 1
        %p206 = scmp.lt.s32.totalorder %s22, 1
        %s207 = scalar_select %p206, %s22, 1
        %p208 = scmp.lt.s32.totalorder %s23, 0
        %s209 = scalar_select %p208, %s23, 0
        %s210 = smul.addr %s207, 2
        %s211 = sadd.s32 %s209, %s210
        %s212 = smul.addr %s211, 8
        %s213 = scalar_lea.vmem %s0, %s212
        %p214 = pneg %p53
        %p215 = pneg %p50
        %p216 = scmp.lt.s32.totalorder %s22, 1
        %s217 = scalar_select %p216, %s22, 1
        %p218 = scmp.lt.s32.totalorder %s23, 0
        %s219 = scalar_select %p218, %s23, 0
        %s220 = smul.addr %s219, 2
        %s221 = smul.addr %s217, 2
        %s222 = sadd.s32 %s220, %s221
        %s223 = smul.addr %s222, 8
        %s224 = scalar_lea.vmem %s1, %s223
        %p225 = pneg %p81
        %p226 = pneg %p78
        %p227 = pneg %p102
        %p228 = pneg %p99
        %p229 = pneg %p123
        %p230 = pneg %p120
        %p231 = pneg %p151
        %p232 = pneg %p148
        %s233 = sand.u32 %s138, 1
        %s234 = scalar_lea.sflag [#allocation3], %s233
        %s235 = sand.u32 %s138, 1
        %s236 = smul.addr %s235, 16
        %s237 = scalar_lea.vmem [#allocation2], %s236
        %p238 = scmp.lt.s32.totalorder %s22, 1
        %s239 = scalar_select %p238, %s22, 1
        %p240 = scmp.lt.s32.totalorder %s23, 0
        %s241 = scalar_select %p240, %s23, 0
        %s242 = smul.addr %s239, 2
        %s243 = sadd.s32 %s241, %s242
        %s244 = smul.addr %s243, 8
        %s245 = scalar_lea.vmem %s0, %s244
        %p246 = scmp.lt.s32.totalorder %s22, 1
        %s247 = scalar_select %p246, %s22, 1
        %p248 = scmp.lt.s32.totalorder %s23, 0
        %s249 = scalar_select %p248, %s23, 0
        %s250 = smul.addr %s249, 2
        %s251 = smul.addr %s247, 2
        %s252 = sadd.s32 %s250, %s251
        %s253 = smul.addr %s252, 8
        %s254 = scalar_lea.vmem %s1, %s253
        %v255 = vld [vmem:[%s245] sm:$0xff]
        %v256 = vld [vmem:[%s245 + $0x8] sm:$0xff]
        %v257 = vld [vmem:[%s254] sm:$0xff]
        %v258 = vld [vmem:[%s254 + $0x8] sm:$0xff]
        %v259 = vld [vmem:[%s2] sm:$0xff]
        %v260 = vld [vmem:[%s2 + $0x8] sm:$0xff]
        %v261 = vld [vmem:[%s2 + $0x10] sm:$0xff]
        %v262 = vld [vmem:[%s2 + $0x18] sm:$0xff]
        %v263 = vld [vmem:[%s2 + $0x20] sm:$0xff]
        %v264 = vld [vmem:[%s2 + $0x28] sm:$0xff]
        %vm265 = vcmask 130048
        %v267 = vsel %vm265, %v259, 0
        %v270 = vsel %vm265, %v260, 0
        %v273 = vsel %vm265, %v261, 0
        %v276 = vsel %vm265, %v262, 0
        %v279 = vsel %vm265, %v263, 0
        %v282 = vsel %vm265, %v264, 0
        %284 = vmatprep.subr.mxu0 0.0
        %285 = vmatpush1.msra.mxu0 %v255
        %286 = vmatprep.subr.mxu0 0.0
        %287 = vmatpush1.msra.mxu0 %v256
        %288 = vmatprep.subr.mxu0 0.0
        %289 = vmatpush1.msra.mxu0 0.0
        %290 = vmatprep.subr.mxu0 0.0
        %291 = vmatpush1.msra.mxu0 0.0
        %292 = vmatprep.subr.mxu0 0.0
        %293 = vmatpush1.msra.mxu0 0.0
        %294 = vmatprep.subr.mxu0 0.0
        %295 = vmatpush1.msra.mxu0 0.0
        %296 = vmatprep.subr.mxu0 0.0
        %297 = vmatpush1.msra.mxu0 0.0
        %298 = vmatprep.subr.mxu0 0.0
        %299 = vmatpush1.msra.mxu0 0.0
        %300 = vmatprep.subr.mxu0 0.0
        %301 = vmatpush1.msra.mxu0 0.0
        %302 = vmatprep.subr.mxu0 0.0
        %303 = vmatpush1.msra.mxu0 0.0
        %304 = vmatprep.subr.mxu0 0.0
        %305 = vmatpush1.msra.mxu0 0.0
        %306 = vmatprep.subr.mxu0 0.0
        %307 = vmatpush1.msra.mxu0 0.0
        %308 = vmatprep.subr.mxu0 0.0
        %309 = vmatpush1.msra.mxu0 0.0
        %310 = vmatprep.subr.mxu0 0.0
        %311 = vmatpush1.msra.mxu0 0.0
        %312 = vmatprep.subr.mxu0 0.0
        %313 = vmatpush1.msra.mxu0 0.0
        %314 = vmatprep.subr.mxu0 0.0
        %315 = vmatpush1.msra.mxu0 0.0
        %316 = vmatprep.subr.mxu0 0.0
        %317 = vmatpush1.msra.mxu0 0.0
        %318 = vmatprep.subr.mxu0 0.0
        %319 = vmatpush1.msra.mxu0 0.0
        %320 = vmatprep.subr.mxu0 0.0
        %321 = vmatpush1.msra.mxu0 0.0
        %322 = vmatprep.subr.mxu0 0.0
        %323 = vmatpush1.msra.mxu0 0.0
        %324 = vmatprep.subr.mxu0 0.0
        %325 = vmatpush1.msra.mxu0 0.0
        %326 = vmatprep.subr.mxu0 0.0
        %327 = vmatpush1.msra.mxu0 0.0
        %328 = vmatprep.subr.mxu0 0.0
        %329 = vmatpush1.msra.mxu0 0.0
        %330 = vmatprep.subr.mxu0 0.0
        %331 = vmatpush1.msra.mxu0 0.0
        %332 = vmatprep.subr.mxu0 0.0
        %333 = vmatpush1.msra.mxu0 0.0
        %334 = vmatprep.subr.mxu0 0.0
        %335 = vmatpush1.msra.mxu0 0.0
        %336 = vmatprep.subr.mxu0 0.0
        %337 = vmatpush1.msra.mxu0 0.0
        %338 = vmatprep.subr.mxu0 0.0
        %339 = vmatpush1.msra.mxu0 0.0
        %340 = vmatprep.subr.mxu0 0.0
        %341 = vmatpush1.msra.mxu0 0.0
        %342 = vmatprep.subr.mxu0 0.0
        %343 = vmatpush1.msra.mxu0 0.0
        %344 = vmatprep.subr.mxu0 0.0
        %345 = vmatpush1.msra.mxu0 0.0
        %346 = vmatprep.subr.mxu0 0.0
        %347 = vmatpush1.msra.mxu0 0.0
        %348 = vmatprep.mubr.f32.mxu0 0.0
        %349 = vmatmul.mubr.f32.gmra.mrb[0].mxu0 %v267
        %v350 = vpop.f32.mrb[0].mxu0
        %v351 = vadd.f32 0.0, %v350
        %v352 = vpop.f32.mrb[0].mxu0
        %353 = vmatprep.mubr.f32.mxu0 0.0
        %354 = vmatmul.mubr.f32.gmra.mrb[0].mxu0 %v270
        %v355 = vpop.f32.mrb[0].mxu0
        %v356 = vadd.f32 0.0, %v355
        %v357 = vpop.f32.mrb[0].mxu0
        %358 = vmatprep.mubr.f32.mxu0 0.0
        %359 = vmatmul.mubr.f32.gmra.mrb[0].mxu0 %v273
        %v360 = vpop.f32.mrb[0].mxu0
        %v361 = vadd.f32 0.0, %v360
        %v362 = vpop.f32.mrb[0].mxu0
        %363 = vmatprep.mubr.f32.mxu0 0.0
        %364 = vmatmul.mubr.f32.gmra.mrb[0].mxu0 %v276
        %v365 = vpop.f32.mrb[0].mxu0
        %v366 = vadd.f32 0.0, %v365
        %v367 = vpop.f32.mrb[0].mxu0
        %368 = vmatprep.mubr.f32.mxu0 0.0
        %369 = vmatmul.mubr.f32.gmra.mrb[0].mxu0 %v279
        %v370 = vpop.f32.mrb[0].mxu0
        %v371 = vadd.f32 0.0, %v370
        %v372 = vpop.f32.mrb[0].mxu0
        %373 = vmatprep.mubr.f32.mxu0 0.0
        %374 = vmatmul.mubr.f32.gmra.mrb[0].mxu0 %v282
        %v375 = vpop.f32.mrb[0].mxu0
        %v376 = vadd.f32 0.0, %v375
        %v377 = vpop.f32.mrb[0].mxu0
        %378 = vdwg.mxu0
        %379 = vmatprep.subr.mxu0 0.0
        %380 = vmatpush1.msra.mxu0 %v257
        %381 = vmatprep.subr.mxu0 0.0
        %382 = vmatpush1.msra.mxu0 %v258
        %383 = vmatprep.subr.mxu0 0.0
        %384 = vmatpush1.msra.mxu0 0.0
        %385 = vmatprep.subr.mxu0 0.0
        %386 = vmatpush1.msra.mxu0 0.0
        %387 = vmatprep.subr.mxu0 0.0
        %388 = vmatpush1.msra.mxu0 0.0
        %389 = vmatprep.subr.mxu0 0.0
        %390 = vmatpush1.msra.mxu0 0.0
        %391 = vmatprep.subr.mxu0 0.0
        %392 = vmatpush1.msra.mxu0 0.0
        %393 = vmatprep.subr.mxu0 0.0
        %394 = vmatpush1.msra.mxu0 0.0
        %395 = vmatprep.subr.mxu0 0.0
        %396 = vmatpush1.msra.mxu0 0.0
        %397 = vmatprep.subr.mxu0 0.0
        %398 = vmatpush1.msra.mxu0 0.0
        %399 = vmatprep.subr.mxu0 0.0
        %400 = vmatpush1.msra.mxu0 0.0
        %401 = vmatprep.subr.mxu0 0.0
        %402 = vmatpush1.msra.mxu0 0.0
        %403 = vmatprep.subr.mxu0 0.0
        %404 = vmatpush1.msra.mxu0 0.0
        %405 = vmatprep.subr.mxu0 0.0
        %406 = vmatpush1.msra.mxu0 0.0
        %407 = vmatprep.subr.mxu0 0.0
        %408 = vmatpush1.msra.mxu0 0.0
        %409 = vmatprep.subr.mxu0 0.0
        %410 = vmatpush1.msra.mxu0 0.0
        %411 = vmatprep.subr.mxu0 0.0
        %412 = vmatpush1.msra.mxu0 0.0
        %413 = vmatprep.subr.mxu0 0.0
        %414 = vmatpush1.msra.mxu0 0.0
        %415 = vmatprep.subr.mxu0 0.0
        %416 = vmatpush1.msra.mxu0 0.0
        %417 = vmatprep.subr.mxu0 0.0
        %418 = vmatpush1.msra.mxu0 0.0
        %419 = vmatprep.subr.mxu0 0.0
        %420 = vmatpush1.msra.mxu0 0.0
        %421 = vmatprep.subr.mxu0 0.0
        %422 = vmatpush1.msra.mxu0 0.0
        %423 = vmatprep.subr.mxu0 0.0
        %424 = vmatpush1.msra.mxu0 0.0
        %425 = vmatprep.subr.mxu0 0.0
        %426 = vmatpush1.msra.mxu0 0.0
        %427 = vmatprep.subr.mxu0 0.0
        %428 = vmatpush1.msra.mxu0 0.0
        %429 = vmatprep.subr.mxu0 0.0
        %430 = vmatpush1.msra.mxu0 0.0
        %431 = vmatprep.subr.mxu0 0.0
        %432 = vmatpush1.msra.mxu0 0.0
        %433 = vmatprep.subr.mxu0 0.0
        %434 = vmatpush1.msra.mxu0 0.0
        %435 = vmatprep.subr.mxu0 0.0
        %436 = vmatpush1.msra.mxu0 0.0
        %437 = vmatprep.subr.mxu0 0.0
        %438 = vmatpush1.msra.mxu0 0.0
        %439 = vmatprep.subr.mxu0 0.0
        %440 = vmatpush1.msra.mxu0 0.0
        %441 = vmatprep.subr.mxu0 0.0
        %442 = vmatpush1.msra.mxu0 0.0
        %443 = vmatprep.mubr.f32.mxu0 0.0
        %444 = vmatmul.mubr.f32.gmra.mrb[0].mxu0 %v267
        %v445 = vpop.f32.mrb[0].mxu0
        %v446 = vadd.f32 0.0, %v445
        %v447 = vpop.f32.mrb[0].mxu0
        %448 = vmatprep.mubr.f32.mxu0 0.0
        %449 = vmatmul.mubr.f32.gmra.mrb[0].mxu0 %v270
        %v450 = vpop.f32.mrb[0].mxu0
        %v451 = vadd.f32 0.0, %v450
        %v452 = vpop.f32.mrb[0].mxu0
        %453 = vmatprep.mubr.f32.mxu0 0.0
        %454 = vmatmul.mubr.f32.gmra.mrb[0].mxu0 %v273
        %v455 = vpop.f32.mrb[0].mxu0
        %v456 = vpop.f32.mrb[0].mxu0
        %457 = vmatprep.mubr.f32.mxu0 0.0
        %458 = vmatmul.mubr.f32.gmra.mrb[0].mxu0 %v276
        %v459 = vpop.f32.mrb[0].mxu0
        %v460 = vpop.f32.mrb[0].mxu0
        %461 = vmatprep.mubr.f32.mxu0 0.0
        %462 = vmatmul.mubr.f32.gmra.mrb[0].mxu0 %v279
        %v463 = vpop.f32.mrb[0].mxu0
        %v464 = vadd.f32 0.0, %v463
        %v465 = vpop.f32.mrb[0].mxu0
        %466 = vmatprep.mubr.f32.mxu0 0.0
        %467 = vmatmul.mubr.f32.gmra.mrb[0].mxu0 %v282
        %v468 = vpop.f32.mrb[0].mxu0
        %v469 = vadd.f32 0.0, %v468
        %v470 = vpop.f32.mrb[0].mxu0
        %471 = vdwg.mxu0
        %v472 = vlaneseq
        %v473 = vand.u32 %v472, 127
        %vm474 = vcmp.eq.s32.totalorder %v473, 0
        %475 = vrot.lane.b32.xlu0 %v351, 1
        %v476 = vpop.permute.xlu0 %475
        %477 = vrot.lane.b32.xlu0 %v356, 1
        %v478 = vpop.permute.xlu0 %477
        %480 = vset.pattern.permute.xlu0 0
        %481 = vperm.xlu0 %480, %v446
        %v482 = vpop.permute.xlu0 %481
        %485 = vset.pattern.permute.xlu0 0
        %486 = vperm.xlu0 %485, %v451
        %v487 = vpop.permute.xlu0 %486
        %v489 = vsel %vm474, %v482, %v476
        %v490 = vsel %vm474, %v487, %v478
        %vm491 = vcmp.eq.s32.totalorder %v473, 127
        %492 = vrot.lane.b32.xlu0 %v371, 127
        %v493 = vpop.permute.xlu0 %492
        %494 = vrot.lane.b32.xlu0 %v376, 127
        %v495 = vpop.permute.xlu0 %494
        %497 = vset.pattern.permute.xlu0 1
        %498 = vperm.xlu0 %497, %v464
        %v499 = vpop.permute.xlu0 %498
        %502 = vset.pattern.permute.xlu0 1
        %503 = vperm.xlu0 %502, %v469
        %v504 = vpop.permute.xlu0 %503
        %v506 = vsel %vm491, %v499, %v493
        %v507 = vsel %vm491, %v504, %v495
        %v508 = vadd.f32 %v361, %v489
        %v509 = vadd.f32 %v366, %v490
        %v510 = vadd.f32 %v508, %v506
        %v511 = vadd.f32 %v509, %v507
        %v512 = vadd.f32 %v510, %v255
        %v513 = vadd.f32 %v511, %v256
        %v514 = vld [vmem:[%s3] sm:$0xff]
        %v515 = vld [vmem:[%s3 + $0x8] sm:$0xff]
        %517 = vset.pattern.permute.xlu0 0
        %518 = vperm.xlu0 %517, %v514
        %v519 = vpop.permute.xlu0 %518
        %522 = vset.pattern.permute.xlu0 0
        %523 = vperm.xlu0 %522, %v515
        %v524 = vpop.permute.xlu0 %523
        %v526 = vadd.f32 %v512, %v519
        %v527 = vadd.f32 %v513, %v524
        %528 = vst [vmem:[%s237] sm:$0xff] %v526
        %529 = vst [vmem:[%s237 + $0x8] sm:$0xff] %v527
        %s530 = sand.u32 %s138, 1
        %s531 = scalar_lea.sflag [#allocation3], %s530
        %s532 = sand.u32 %s138, 1
        %s533 = smul.addr %s532, 16
        %s534 = scalar_lea.vmem [#allocation2], %s533
        // Predicated region
        $region37: #{tpu_custom_call.1} parent=35 // pred_check
          %p535 = pneg %p148
        $region38: #{tpu_custom_call.1} parent=35 // pred_check_branch
          %537 = sbr.rel (%p535) target = $region40
        $region39: #{tpu_custom_call.1} parent=35 // pred_region
          %s539 = ssub.s32 256, 256
          %540 = vsyncadd %s531, %s539
          %s541 = smul.addr %s22, 2
          %s542 = sadd.s32 %s23, %s541
          %s543 = smul.addr %s542, 128
          %s544 = scalar_lea.hbm %s4, %s543
          %s545 = sshll.u32 %s534, 4
          %s546 = int_to_ptr.vmem [resolvable:$true] %s545
          %551 = dma.vmem_to_hbm [thread:$0]  %s546, 256, %s544, %s531, 128, 128, 8
        $region40: #{tpu_custom_call.1} parent=35 // pred_fallthru
          _
      $region36: #{tpu_custom_call.1} parent=5 // pred_fallthru
        _
      %p552 = scmp.le.s32.totalorder 2, %s13
      // Predicated region
      $region41: #{tpu_custom_call.1} parent=5 // pred_check
        %p553 = pneg %p552
      $region42: #{tpu_custom_call.1} parent=5 // pred_check_branch
        %555 = sbr.rel (%p553) target = $region44
      $region43: #{tpu_custom_call.1} parent=5 // pred_region
        %s556 = ssub.s32 %s13, 2
        // Predicated region
        $region45: #{tpu_custom_call.1} parent=43 // pred_check
          %p557 = pneg %p154
        $region46: #{tpu_custom_call.1} parent=43 // pred_check_branch
          %559 = sbr.rel (%p557) target = $region48
        $region47: #{tpu_custom_call.1} parent=43 // pred_region
          %s560 = sand.u32 %s139, 1
          %s561 = scalar_lea.sflag [#allocation3], %s560
          %s562 = sand.u32 %s139, 1
          %s563 = smul.addr %s562, 16
          %s564 = scalar_lea.vmem [#allocation2], %s563
          %565 = dma.done %s561, 256
        $region48: #{tpu_custom_call.1} parent=43 // pred_fallthru
          _
      $region44: #{tpu_custom_call.1} parent=5 // pred_fallthru
        _
    $region6: #{tpu_custom_call.1} parent=1 // loop_footer
      %s17 = sadd.s32 1, %s13
    $region7: #{tpu_custom_call.1} parent=1 // loop_footer_branch
      %12 = sbr.rel target = $region3
    $region8: #{tpu_custom_call.1} parent=1 // loop_exit
      _
    %566 = vsyncpa [#allocation3], 1
    %s567 = scalar_lea.sflag [#allocation3], 1
    %568 = vsyncpa %s567, 1

</llo_original>
